<compile_context>
chip_gen: v5e
topology: v5e:2x2
jax: 0.10.0
libtpu: 0.0.40
codegen_flags: <defaults>
</compile_context>

<pallas_src>
import jax
import jax.numpy as jnp
from jax.experimental import pallas as pl
from jax.experimental.pallas import tpu as pltpu


LTK = 128  # pixels per cumsum chunk (one lane tile)
# TODO(synk): on v6e/v7x a 256-wide chunk would fill the 256x256 MXU tiles; kept
# at 128 (the v5e-native size) since kernel 2 is DMA/step-overhead bound.


# ----------------------------------------------------------------------------
# Kernel 1: softmax over classes + per-pixel CE nll + per-class Lovász errors
#           |fg - p_c| and one-hot fg (bf16).  Outputs written straight into a
#           class-major (C, P) layout; no accumulators -> fully parallel grid.
# ----------------------------------------------------------------------------
def softmax_ce_err_kernel(logits_ref, labels_ref, err_ref, fg_ref, nll_ref):
    logits = logits_ref[0]                                   # (C, TP) f32
    labels = labels_ref[0]                                   # (1, TP) int32

    # softmax / log-softmax over the class (sublane) axis
    m = jnp.max(logits, axis=0, keepdims=True)               # (1, TP)
    z = jnp.exp(logits - m)
    s = jnp.sum(z, axis=0, keepdims=True)
    inv_s = 1.0 / s                                          # one (1,TP) divide
    probs = z * inv_s                                        # VPU mults, not C*TP divides
    log_probs = (logits - m) - jnp.log(s)                    # (C, TP)

    cls = jax.lax.broadcasted_iota(jnp.int32, logits.shape, 0)
    fg = (labels == cls).astype(jnp.float32)                 # one-hot (C, TP)

    err_ref[...] = jnp.abs(fg - probs)                       # f32 sort keys
    fg_ref[...] = fg.astype(jnp.bfloat16)                    # exact 0/1, halves payload
    nll_ref[...] = -jnp.sum(fg * log_probs, axis=0, keepdims=True)   # (1, TP)


# ----------------------------------------------------------------------------
# Kernel 2: streaming Lovász extension on the sorted errors.
# Rows are packed class-major (row = class*NB + chunk); each row is independent
# given its (offs, gts, base) metadata, so blocks may straddle class boundaries.
# ----------------------------------------------------------------------------
def lovasz_kernel(errp_ref, fgp_ref, tri_ref, meta_ref, out_ref, acc_ref):
    i = pl.program_id(1)
    nsteps = pl.num_programs(1)

    @pl.when(i == 0)
    def _():
        acc_ref[...] = jnp.zeros_like(acc_ref)

    err = errp_ref[...]                        # (RB, 128) f32, sorted desc per class
    fg_bf = fgp_ref[...]                       # (RB, 128) bf16 one-hot, co-sorted
    fg = fg_bf.astype(jnp.float32)
    meta = meta_ref[...]                       # (RB, 3) f32
    offs = meta[:, 0:1]                        # fg count before this chunk (per class)
    gts = meta[:, 1:2]                         # per-class totals
    base = meta[:, 2:3]                        # chunk start position within its class

    # within-chunk inclusive cumsum on the MXU (bf16 0/1 operands, f32 accumulate
    # -> exact integers): (RB, 128) @ (128, 128) upper-tri.
    cum_local = jnp.dot(fg_bf, tri_ref[...], preferred_element_type=jnp.float32)
    cum_fg = cum_local + offs                  # global (per-class) inclusive cumsum

    lane = jax.lax.broadcasted_iota(jnp.int32, err.shape, 1).astype(jnp.float32)
    pos = base + lane + 1.0                    # 1-based position within the class
    cum_not = pos - cum_fg                     # cumsum of (1 - fg)

    inter = gts - cum_fg
    union = gts + cum_not                      # >= 1 at every real position
    # previous-position jaccard; at pos 1 this evaluates to 0 (grad[0]==jac[0]).
    # union_p can only be 0 for absent classes, which `present` zeroes anyway.
    cum_fg_p = cum_fg - fg
    inter_p = gts - cum_fg_p
    union_p = jnp.maximum(gts + (pos - 1.0) - cum_fg_p, 1.0)
    # grad = jac - jac_prev, fused into a single divide per tile
    grad = (inter_p * union - inter * union_p) / (union * union_p)

    present = (gts > 0.0).astype(jnp.float32)  # (RB, 1)
    acc_ref[...] = acc_ref[...] + jnp.sum(err * grad * present)

    @pl.when(i == nsteps - 1)
    def _():
        out_ref[...] = jnp.broadcast_to(acc_ref[...], out_ref.shape)


# ----------------------------------------------------------------------------
# Static tiling helpers (shapes are static under jit)
# ----------------------------------------------------------------------------
def _round_up(x, m):
    return ((x + m - 1) // m) * m


def _pick_tp(hw, c):
    """Largest 128-multiple pixel tile dividing H*W, capped so the
    double-buffered kernel-1 working set stays <= ~12 MiB on every generation
    (fits the v5e 16 MiB scoped-VMEM default; well under v7x's 64 MiB)."""
    cp8 = _round_up(c, 8)        # f32 sublane padding
    cp16 = _round_up(c, 16)      # bf16 sublane padding
    per_lane = 2 * (4 * cp8 + 4 * cp8 + 2 * cp16 + 4 * 8 + 4 * 8)
    budget = 12 << 20
    cap = max(128, min(8192, (budget // per_lane) // 128 * 128))
    best, tp = 128, 128
    while tp <= min(cap, hw):
        if hw % tp == 0:
            best = tp
        tp += 128
    return best


def _pick_block_rows(rows, cap=2048):
    """Rows of (row, 128) data per kernel-2 grid step: divides `rows`, multiple
    of 8 (sublane tile) unless it covers the whole array.  ~2.5 MiB per buffer
    set at the 2048 cap, well under every scoped-VMEM default."""
    if rows <= cap:
        return rows
    r = (cap // 8) * 8
    while r >= 8:
        if rows % r == 0:
            return r
        r -= 8
    # TODO(synk): awkward row counts (no 8-aligned divisor) fall back to one big
    # block; padding with zero-gts rows (which contribute nothing) would be the
    # general fix if this ever matters.
    return rows


# ----------------------------------------------------------------------------
# Wrapper
# ----------------------------------------------------------------------------
@jax.jit
def rovasz_ce_loss(inputs, target):
    N, C, H, W = inputs.shape
    HW = H * W
    P = N * HW
    assert HW % LTK == 0, "H*W must be a multiple of 128"
    # TODO(synk): general pixel counts need padding plus masking of the padded
    # pixels in the CE mean and in the Lovász cumulative sums.

    logits = inputs.reshape(N, C, HW).astype(jnp.float32)    # free reshape, no transpose
    labels = target.reshape(N, 1, HW).astype(jnp.int32)      # free reshape

    # -------------------- kernel 1: softmax / CE / errors --------------------
    TP = _pick_tp(HW, C)
    GP = HW // TP
    errors, fg, nll = pl.pallas_call(
        softmax_ce_err_kernel,
        out_shape=(
            jax.ShapeDtypeStruct((C, P), jnp.float32),
            jax.ShapeDtypeStruct((C, P), jnp.bfloat16),
            jax.ShapeDtypeStruct((1, P), jnp.float32),
        ),
        grid=(N, GP),
        in_specs=[
            pl.BlockSpec((1, C, TP), lambda n, p: (n, 0, p)),
            pl.BlockSpec((1, 1, TP), lambda n, p: (n, 0, p)),
        ],
        out_specs=(
            pl.BlockSpec((C, TP), lambda n, p: (0, n * GP + p)),
            pl.BlockSpec((C, TP), lambda n, p: (0, n * GP + p)),
            pl.BlockSpec((1, TP), lambda n, p: (0, n * GP + p)),
        ),
        compiler_params=pltpu.CompilerParams(
            dimension_semantics=("parallel", "parallel")),
    )(logits, labels)

    # --------------- glue: per-class descending sort (XLA) -------------------
    # TODO(synk): per-class descending sort has no clean Pallas TPU equivalent;
    # done with lax.sort, carrying the bf16 one-hot alongside.  Packing the fg
    # bit into the key mantissa would shrink sort traffic further, but changes
    # tie ordering vs the stable two-key reference, so it is not done here.
    neg_sorted, fg_sorted = jax.lax.sort(
        (-errors, fg), dimension=1, num_keys=1, is_stable=True)
    errors_sorted = -neg_sorted

    # --------------- glue: tiny per-chunk prefix bookkeeping -----------------
    NB = P // LTK                          # 128-pixel chunks per class
    ROWS = C * NB                          # class-major packed row = class*NB + chunk
    errp = errors_sorted.reshape(ROWS, LTK)    # free reshape (no transpose pass)
    fgp = fg_sorted.reshape(ROWS, LTK)         # free reshape (no transpose pass)

    chunk_sums = fg_sorted.astype(jnp.float32).reshape(C, NB, LTK).sum(axis=2)
    gts = chunk_sums.sum(axis=1)                               # (C,) per-class totals
    excl = jnp.cumsum(chunk_sums, axis=1) - chunk_sums         # (C, NB) exclusive prefix
    base = jnp.broadcast_to(
        (jnp.arange(NB, dtype=jnp.float32) * LTK)[None, :], (C, NB))
    gts_b = jnp.broadcast_to(gts[:, None], (C, NB))
    meta = jnp.stack([excl, gts_b, base], axis=-1).reshape(ROWS, 3)

    tri = jnp.triu(jnp.ones((LTK, LTK), jnp.float32)).astype(jnp.bfloat16)

    # --------------- kernel 2: streaming Lovász extension --------------------
    RB = _pick_block_rows(ROWS)
    nsteps = ROWS // RB
    ncores = 2 if (nsteps % 2 == 0 and nsteps >= 2) else 1    # megacore split (v7x)
    spc = nsteps // ncores                                     # steps per core

    partials = pl.pallas_call(
        lovasz_kernel,
        out_shape=jax.ShapeDtypeStruct((ncores * 8, 128), jnp.float32),
        grid=(ncores, spc),
        in_specs=[
            pl.BlockSpec((RB, LTK), lambda c, i: (c * spc + i, 0)),    # errp
            pl.BlockSpec((RB, LTK), lambda c, i: (c * spc + i, 0)),    # fgp (bf16)
            pl.BlockSpec((LTK, LTK), lambda c, i: (0, 0)),             # tri (constant)
            pl.BlockSpec((RB, 3), lambda c, i: (c * spc + i, 0)),      # meta
        ],
        out_specs=pl.BlockSpec((8, 128), lambda c, i: (c, 0)),
        scratch_shapes=[pltpu.VMEM((1, 1), jnp.float32)],              # per-core accum
        compiler_params=pltpu.CompilerParams(
            dimension_semantics=("parallel", "arbitrary")),
    )(errp, fgp, tri, meta)

    lovasz_sum = jnp.sum(partials.reshape(ncores, 8, 128)[:, 0, 0])
    n_present = jnp.sum((gts > 0.0).astype(jnp.float32))
    lovasz = lovasz_sum / jnp.maximum(n_present, 1.0)
    ce = jnp.sum(nll) * (1.0 / float(P))
    return lovasz + ce


# ----------------------------------------------------------------------------
# Pure-JAX reference (for correctness check only)
# ----------------------------------------------------------------------------
def reference_loss(inputs, target):
    N, C, H, W = inputs.shape
    logits = jnp.transpose(inputs, (0, 2, 3, 1)).reshape(-1, C)
    labels = target.reshape(-1)
    logp = jax.nn.log_softmax(logits, axis=1)
    ce = -jnp.mean(logp[jnp.arange(labels.shape[0]), labels])
    probs = jax.nn.softmax(logits, axis=1)

    losses, present = [], []
    for c in range(C):
        fg = (labels == c).astype(jnp.float32)
        errs = jnp.abs(fg - probs[:, c])
        order = jnp.argsort(-errs, stable=True)
        e_s, fg_s = errs[order], fg[order]
        gts = fg_s.sum()
        inter = gts - jnp.cumsum(fg_s)
        union = gts + jnp.cumsum(1.0 - fg_s)
        jac = 1.0 - inter / union
        grad = jnp.concatenate([jac[:1], jac[1:] - jac[:-1]])
        losses.append(jnp.sum(e_s * grad))
        present.append((gts > 0).astype(jnp.float32))
    losses = jnp.stack(losses)
    present = jnp.stack(present)
    lovasz = jnp.sum(losses * present) / jnp.maximum(jnp.sum(present), 1.0)
    return lovasz + ce


if __name__ == "__main__":
    key = jax.random.PRNGKey(0)
    k1, k2 = jax.random.split(key)
    N, C, H, W = 2, 4, 16, 16
    inputs = jax.random.normal(k1, (N, C, H, W), dtype=jnp.float32)
    target = jax.random.randint(k2, (N, H, W), 0, C, dtype=jnp.int32)

    out = rovasz_ce_loss(inputs, target)
    out = jax.block_until_ready(out)

    ref = reference_loss(inputs, target)
    assert jnp.allclose(out, ref, atol=1e-4, rtol=1e-4), (out, ref)
    print("KERNEL_OK")
</pallas_src>

<mosaic_0001>
module attributes {stable_mosaic.version = 11 : i64} {
  func.func @softmax_ce_err_kernel(%arg0: i32, %arg1: i32, %arg2: memref<1x4x256xf32, #tpu.memory_space<vmem>>, %arg3: memref<1x1x256xi32, #tpu.memory_space<vmem>>, %arg4: memref<4x256xf32, #tpu.memory_space<vmem>>, %arg5: memref<4x256xbf16, #tpu.memory_space<vmem>>, %arg6: memref<1x256xf32, #tpu.memory_space<vmem>>) attributes {dimension_semantics = [#tpu.dimension_semantics<parallel>, #tpu.dimension_semantics<parallel>], iteration_bounds = array<i64: 2, 1>, scalar_prefetch = 0 : i64, scratch_operands = 0 : i64, tpu.core_type = #tpu.core_type<tc>, window_params = [{transform_indices = @transform_0, window_bounds = array<i64: 1, 4, 256>}, {transform_indices = @transform_1, window_bounds = array<i64: 1, 1, 256>}, {transform_indices = @transform_2, window_bounds = array<i64: 4, 256>}, {transform_indices = @transform_3, window_bounds = array<i64: 4, 256>}, {transform_indices = @transform_4, window_bounds = array<i64: 1, 256>}]} {
    %c0 = arith.constant 0 : index
    %c0_0 = arith.constant 0 : index
    %c0_1 = arith.constant 0 : index
    %0 = vector.load %arg2[%c0, %c0_0, %c0_1] : memref<1x4x256xf32, #tpu.memory_space<vmem>>, vector<1x4x256xf32>
    %1 = vector.shape_cast %0 : vector<1x4x256xf32> to vector<4x256xf32>
    %c0_2 = arith.constant 0 : index
    %c0_3 = arith.constant 0 : index
    %c0_4 = arith.constant 0 : index
    %2 = vector.load %arg3[%c0_2, %c0_3, %c0_4] : memref<1x1x256xi32, #tpu.memory_space<vmem>>, vector<1x1x256xi32>
    %3 = vector.shape_cast %2 : vector<1x1x256xi32> to vector<1x256xi32>
    %cst = arith.constant dense<0xFF800000> : vector<256xf32>
    %4 = vector.multi_reduction <maximumf>, %1, %cst [0] : vector<4x256xf32> to vector<256xf32>
    %5 = vector.shape_cast %4 : vector<256xf32> to vector<1x256xf32>
    %6 = vector.broadcast %5 : vector<1x256xf32> to vector<4x256xf32>
    %7 = arith.subf %1, %6 : vector<4x256xf32>
    %8 = math.exp %7 : vector<4x256xf32>
    %cst_5 = arith.constant dense<0.000000e+00> : vector<256xf32>
    %9 = vector.multi_reduction <add>, %8, %cst_5 [0] : vector<4x256xf32> to vector<256xf32>
    %10 = vector.shape_cast %9 : vector<256xf32> to vector<1x256xf32>
    %cst_6 = arith.constant 1.000000e+00 : f32
    %11 = vector.broadcast %cst_6 : f32 to vector<1x256xf32>
    %12 = arith.divf %11, %10 : vector<1x256xf32>
    %13 = vector.broadcast %12 : vector<1x256xf32> to vector<4x256xf32>
    %14 = arith.mulf %8, %13 : vector<4x256xf32>
    %15 = vector.broadcast %5 : vector<1x256xf32> to vector<4x256xf32>
    %16 = arith.subf %1, %15 : vector<4x256xf32>
    %17 = math.log %10 : vector<1x256xf32>
    %18 = vector.broadcast %17 : vector<1x256xf32> to vector<4x256xf32>
    %19 = arith.subf %16, %18 : vector<4x256xf32>
    %20 = tpu.iota {dimensions = array<i32: 0>} : vector<4x256xi32>
    %21 = vector.broadcast %3 : vector<1x256xi32> to vector<4x256xi32>
    %22 = arith.cmpi eq, %21, %20 : vector<4x256xi32>
    %23 = arith.extui %22 : vector<4x256xi1> to vector<4x256xi32>
    %24 = arith.sitofp %23 : vector<4x256xi32> to vector<4x256xf32>
    %25 = arith.subf %24, %14 : vector<4x256xf32>
    %26 = math.absf %25 : vector<4x256xf32>
    %c0_7 = arith.constant 0 : index
    %c0_8 = arith.constant 0 : index
    %27 = vector.load %arg4[%c0_7, %c0_8] : memref<4x256xf32, #tpu.memory_space<vmem>>, vector<4x256xf32>
    tpu.vector_store %arg4[%c0_7, %c0_8], %26 {strides = array<i32>} : memref<4x256xf32, #tpu.memory_space<vmem>>, vector<4x256xf32>,
    %28 = arith.truncf %24 : vector<4x256xf32> to vector<4x256xbf16>
    %c0_9 = arith.constant 0 : index
    %c0_10 = arith.constant 0 : index
    %29 = vector.load %arg5[%c0_9, %c0_10] : memref<4x256xbf16, #tpu.memory_space<vmem>>, vector<4x256xbf16>
    tpu.vector_store %arg5[%c0_9, %c0_10], %28 {strides = array<i32>} : memref<4x256xbf16, #tpu.memory_space<vmem>>, vector<4x256xbf16>,
    %30 = arith.mulf %24, %19 : vector<4x256xf32>
    %cst_11 = arith.constant dense<0.000000e+00> : vector<256xf32>
    %31 = vector.multi_reduction <add>, %30, %cst_11 [0] : vector<4x256xf32> to vector<256xf32>
    %32 = vector.shape_cast %31 : vector<256xf32> to vector<1x256xf32>
    %cst_12 = arith.constant 0.000000e+00 : f32
    %33 = vector.broadcast %cst_12 : f32 to vector<1x256xf32>
    %34 = arith.subf %33, %32 : vector<1x256xf32>
    %c0_13 = arith.constant 0 : index
    %c0_14 = arith.constant 0 : index
    %35 = vector.load %arg6[%c0_13, %c0_14] : memref<1x256xf32, #tpu.memory_space<vmem>>, vector<1x256xf32>
    tpu.vector_store %arg6[%c0_13, %c0_14], %34 {strides = array<i32>} : memref<1x256xf32, #tpu.memory_space<vmem>>, vector<1x256xf32>,
    return
  }
  func.func @transform_0(%arg0: i32, %arg1: i32) -> (i32, i32, i32) {
    %c0_i32 = arith.constant 0 : i32
    %c0_i32_0 = arith.constant 0 : i32
    return %arg0, %c0_i32, %arg1 : i32, i32, i32
  }
  func.func @transform_1(%arg0: i32, %arg1: i32) -> (i32, i32, i32) {
    %c0_i32 = arith.constant 0 : i32
    %c0_i32_0 = arith.constant 0 : i32
    return %arg0, %c0_i32, %arg1 : i32, i32, i32
  }
  func.func @transform_2(%arg0: i32, %arg1: i32) -> (i32, i32) {
    %c1_i32 = arith.constant 1 : i32
    %0 = arith.muli %arg0, %c1_i32 : i32
    %1 = arith.addi %0, %arg1 : i32
    %c0_i32 = arith.constant 0 : i32
    %c0_i32_0 = arith.constant 0 : i32
    return %c0_i32, %1 : i32, i32
  }
  func.func @transform_3(%arg0: i32, %arg1: i32) -> (i32, i32) {
    %c1_i32 = arith.constant 1 : i32
    %0 = arith.muli %arg0, %c1_i32 : i32
    %1 = arith.addi %0, %arg1 : i32
    %c0_i32 = arith.constant 0 : i32
    %c0_i32_0 = arith.constant 0 : i32
    return %c0_i32, %1 : i32, i32
  }
  func.func @transform_4(%arg0: i32, %arg1: i32) -> (i32, i32) {
    %c1_i32 = arith.constant 1 : i32
    %0 = arith.muli %arg0, %c1_i32 : i32
    %1 = arith.addi %0, %arg1 : i32
    %c0_i32 = arith.constant 0 : i32
    %c0_i32_0 = arith.constant 0 : i32
    return %c0_i32, %1 : i32, i32
  }
}

module attributes {stable_mosaic.version = 11 : i64} {
  func.func @lovasz_kernel(%arg0: i32, %arg1: i32, %arg2: memref<16x128xf32, #tpu.memory_space<vmem>>, %arg3: memref<16x128xbf16, #tpu.memory_space<vmem>>, %arg4: memref<128x128xbf16, #tpu.memory_space<vmem>>, %arg5: memref<16x3xf32, #tpu.memory_space<vmem>>, %arg6: memref<8x128xf32, #tpu.memory_space<vmem>>, %arg7: memref<1x1xf32, #tpu.memory_space<vmem>>) attributes {dimension_semantics = [#tpu.dimension_semantics<parallel>, #tpu.dimension_semantics<arbitrary>], iteration_bounds = array<i64: 1, 1>, scalar_prefetch = 0 : i64, scratch_operands = 1 : i64, tpu.core_type = #tpu.core_type<tc>, window_params = [{transform_indices = @transform_0, window_bounds = array<i64: 16, 128>}, {transform_indices = @transform_1, window_bounds = array<i64: 16, 128>}, {pipeline_mode = #tpu.pipeline_mode<synchronous>, transform_indices = @transform_2, window_bounds = array<i64: 128, 128>}, {transform_indices = @transform_3, window_bounds = array<i64: 16, 3>}, {transform_indices = @transform_4, window_bounds = array<i64: 8, 128>}]} {
    %c0_i32 = arith.constant 0 : i32
    %0 = arith.cmpi eq, %arg1, %c0_i32 : i32
    %1 = arith.extui %0 : i1 to i32
    %c0_i32_0 = arith.constant 0 : i32
    %2 = arith.cmpi ne, %1, %c0_i32_0 : i32
    scf.if %2 {
      %cst_19 = arith.constant 0.000000e+00 : f32
      %58 = vector.broadcast %cst_19 : f32 to vector<1x1xf32>
      %c0_20 = arith.constant 0 : index
      %c0_21 = arith.constant 0 : index
      %59 = vector.load %arg7[%c0_20, %c0_21] : memref<1x1xf32, #tpu.memory_space<vmem>>, vector<1x1xf32>
      tpu.vector_store %arg7[%c0_20, %c0_21], %58 {strides = array<i32>} : memref<1x1xf32, #tpu.memory_space<vmem>>, vector<1x1xf32>,
    } else {
    }
    %c0 = arith.constant 0 : index
    %c0_1 = arith.constant 0 : index
    %3 = vector.load %arg2[%c0, %c0_1] : memref<16x128xf32, #tpu.memory_space<vmem>>, vector<16x128xf32>
    %c0_2 = arith.constant 0 : index
    %c0_3 = arith.constant 0 : index
    %4 = vector.load %arg3[%c0_2, %c0_3] : memref<16x128xbf16, #tpu.memory_space<vmem>>, vector<16x128xbf16>
    %5 = arith.extf %4 : vector<16x128xbf16> to vector<16x128xf32>
    %c0_4 = arith.constant 0 : index
    %c0_5 = arith.constant 0 : index
    %6 = vector.load %arg5[%c0_4, %c0_5] : memref<16x3xf32, #tpu.memory_space<vmem>>, vector<16x3xf32>
    %7 = vector.extract_strided_slice %6 {offsets = [0, 0], sizes = [16, 1], strides = [1, 1]} : vector<16x3xf32> to vector<16x1xf32>
    %8 = vector.extract_strided_slice %6 {offsets = [0, 1], sizes = [16, 1], strides = [1, 1]} : vector<16x3xf32> to vector<16x1xf32>
    %9 = vector.extract_strided_slice %6 {offsets = [0, 2], sizes = [16, 1], strides = [1, 1]} : vector<16x3xf32> to vector<16x1xf32>
    %c0_6 = arith.constant 0 : index
    %c0_7 = arith.constant 0 : index
    %10 = vector.load %arg4[%c0_6, %c0_7] : memref<128x128xbf16, #tpu.memory_space<vmem>>, vector<128x128xbf16>
    %cst = arith.constant dense<0.000000e+00> : vector<16x128xf32>
    %11 = tpu.matmul %4, %10, %cst {dimension_numbers = #tpu.dot_dimension_numbers<[1], [0], [0], [1], [0, 0, 1, 1], [], []>} : vector<16x128xbf16>, vector<128x128xbf16>, vector<16x128xf32> -> vector<16x128xf32>
    %12 = vector.broadcast %7 : vector<16x1xf32> to vector<16x128xf32>
    %13 = arith.addf %11, %12 : vector<16x128xf32>
    %14 = tpu.iota {dimensions = array<i32: 1>} : vector<16x128xi32>
    %15 = arith.sitofp %14 : vector<16x128xi32> to vector<16x128xf32>
    %16 = vector.broadcast %9 : vector<16x1xf32> to vector<16x128xf32>
    %17 = arith.addf %16, %15 : vector<16x128xf32>
    %cst_8 = arith.constant 1.000000e+00 : f32
    %18 = vector.broadcast %cst_8 : f32 to vector<16x128xf32>
    %19 = arith.addf %17, %18 : vector<16x128xf32>
    %20 = arith.subf %19, %13 : vector<16x128xf32>
    %21 = vector.broadcast %8 : vector<16x1xf32> to vector<16x128xf32>
    %22 = arith.subf %21, %13 : vector<16x128xf32>
    %23 = vector.broadcast %8 : vector<16x1xf32> to vector<16x128xf32>
    %24 = arith.addf %23, %20 : vector<16x128xf32>
    %25 = arith.subf %13, %5 : vector<16x128xf32>
    %26 = vector.broadcast %8 : vector<16x1xf32> to vector<16x128xf32>
    %27 = arith.subf %26, %25 : vector<16x128xf32>
    %cst_9 = arith.constant 1.000000e+00 : f32
    %28 = vector.broadcast %cst_9 : f32 to vector<16x128xf32>
    %29 = arith.subf %19, %28 : vector<16x128xf32>
    %30 = vector.broadcast %8 : vector<16x1xf32> to vector<16x128xf32>
    %31 = arith.addf %30, %29 : vector<16x128xf32>
    %32 = arith.subf %31, %25 : vector<16x128xf32>
    %cst_10 = arith.constant 1.000000e+00 : f32
    %33 = vector.broadcast %cst_10 : f32 to vector<16x128xf32>
    %34 = arith.maximumf %32, %33 : vector<16x128xf32>
    %35 = arith.mulf %27, %24 : vector<16x128xf32>
    %36 = arith.mulf %22, %34 : vector<16x128xf32>
    %37 = arith.subf %35, %36 : vector<16x128xf32>
    %38 = arith.mulf %24, %34 : vector<16x128xf32>
    %39 = arith.divf %37, %38 : vector<16x128xf32>
    %cst_11 = arith.constant 0.000000e+00 : f32
    %40 = vector.broadcast %cst_11 : f32 to vector<16x1xf32>
    %41 = arith.cmpf ogt, %8, %40 : vector<16x1xf32>
    %42 = arith.extui %41 : vector<16x1xi1> to vector<16x1xi32>
    %43 = arith.sitofp %42 : vector<16x1xi32> to vector<16x1xf32>
    %c0_12 = arith.constant 0 : index
    %c0_13 = arith.constant 0 : index
    %44 = vector.load %arg7[%c0_12, %c0_13] : memref<1x1xf32, #tpu.memory_space<vmem>>, vector<1x1xf32>
    %45 = arith.mulf %3, %39 : vector<16x128xf32>
    %46 = vector.broadcast %43 : vector<16x1xf32> to vector<16x128xf32>
    %47 = arith.mulf %45, %46 : vector<16x128xf32>
    %48 = vector.shape_cast %47 : vector<16x128xf32> to vector<1x16x128xf32>
    %cst_14 = arith.constant dense<0.000000e+00> : vector<1xf32>
    %49 = vector.multi_reduction <add>, %48, %cst_14 [1, 2] : vector<1x16x128xf32> to vector<1xf32>
    %50 = vector.shape_cast %49 : vector<1xf32> to vector<1x1x1xf32>
    %51 = vector.extract %50[0, 0, 0] : f32 from vector<1x1x1xf32>
    %52 = vector.broadcast %51 : f32 to vector<1x1xf32>
    %53 = arith.addf %44, %52 : vector<1x1xf32>
    %c0_15 = arith.constant 0 : index
    %c0_16 = arith.constant 0 : index
    %54 = vector.load %arg7[%c0_15, %c0_16] : memref<1x1xf32, #tpu.memory_space<vmem>>, vector<1x1xf32>
    tpu.vector_store %arg7[%c0_15, %c0_16], %53 {strides = array<i32>} : memref<1x1xf32, #tpu.memory_space<vmem>>, vector<1x1xf32>,
    %c0_i32_17 = arith.constant 0 : i32
    %55 = arith.cmpi eq, %arg1, %c0_i32_17 : i32
    %56 = arith.extui %55 : i1 to i32
    %c0_i32_18 = arith.constant 0 : i32
    %57 = arith.cmpi ne, %56, %c0_i32_18 : i32
    scf.if %57 {
      %c0_19 = arith.constant 0 : index
      %c0_20 = arith.constant 0 : index
      %58 = vector.load %arg7[%c0_19, %c0_20] : memref<1x1xf32, #tpu.memory_space<vmem>>, vector<1x1xf32>
      %59 = vector.shape_cast %58 : vector<1x1xf32> to vector<1x1xf32>
      %60 = vector.broadcast %59 : vector<1x1xf32> to vector<8x128xf32>
      %c0_21 = arith.constant 0 : index
      %c0_22 = arith.constant 0 : index
      %61 = vector.load %arg6[%c0_21, %c0_22] : memref<8x128xf32, #tpu.memory_space<vmem>>, vector<8x128xf32>
      tpu.vector_store %arg6[%c0_21, %c0_22], %60 {strides = array<i32>} : memref<8x128xf32, #tpu.memory_space<vmem>>, vector<8x128xf32>,
    } else {
    }
    return
  }
  func.func @transform_0(%arg0: i32, %arg1: i32) -> (i32, i32) {
    %c1_i32 = arith.constant 1 : i32
    %0 = arith.muli %arg0, %c1_i32 : i32
    %1 = arith.addi %0, %arg1 : i32
    %c0_i32 = arith.constant 0 : i32
    %c0_i32_0 = arith.constant 0 : i32
    return %1, %c0_i32 : i32, i32
  }
  func.func @transform_1(%arg0: i32, %arg1: i32) -> (i32, i32) {
    %c1_i32 = arith.constant 1 : i32
    %0 = arith.muli %arg0, %c1_i32 : i32
    %1 = arith.addi %0, %arg1 : i32
    %c0_i32 = arith.constant 0 : i32
    %c0_i32_0 = arith.constant 0 : i32
    return %1, %c0_i32 : i32, i32
  }
  func.func @transform_2(%arg0: i32, %arg1: i32) -> (i32, i32) {
    %c0_i32 = arith.constant 0 : i32
    %c0_i32_0 = arith.constant 0 : i32
    %c0_i32_1 = arith.constant 0 : i32
    return %c0_i32, %c0_i32_0 : i32, i32
  }
  func.func @transform_3(%arg0: i32, %arg1: i32) -> (i32, i32) {
    %c1_i32 = arith.constant 1 : i32
    %0 = arith.muli %arg0, %c1_i32 : i32
    %1 = arith.addi %0, %arg1 : i32
    %c0_i32 = arith.constant 0 : i32
    %c0_i32_0 = arith.constant 0 : i32
    return %1, %c0_i32 : i32, i32
  }
  func.func @transform_4(%arg0: i32, %arg1: i32) -> (i32, i32) {
    %c0_i32 = arith.constant 0 : i32
    %c0_i32_0 = arith.constant 0 : i32
    return %arg0, %c0_i32 : i32, i32
  }
}

</mosaic_0001>

<llo_original>
// kernel: neg.2
$region0: #{neg.2}
  #allocation0 [shape = 's32[1]{0}', space=sflag, size = 0x4, scoped, tag = 'scoped memory for neg.2']
  %s0 = inlined_call_operand.vmem [shape: f32[4,512], index: 0, kind: input, shape index: {}]
  %s1 = inlined_call_operand.vmem [shape: f32[4,512], index: 1, kind: output, shape index: {}]
  %v2 = vld [vmem:[%s0] sm:$0xf]
  %3 = xla_tuple %v2
  %4 = xla_tuple %3
  %v5 = vxor.u32 %v2, 2147483648
  %6 = xla_tuple %v5
  %7 = vst [vmem:[%s1] sm:$0xf] %v5
  %s8 = scalar_lea.vmem %s0, 4
  %v9 = vld [vmem:[%s8] sm:$0xf]
  %10 = xla_tuple %v9
  %11 = xla_tuple %10
  %v12 = vxor.u32 %v9, 2147483648
  %13 = xla_tuple %v12
  %s14 = scalar_lea.vmem %s1, 4
  %15 = vst [vmem:[%s14] sm:$0xf] %v12
  %s16 = scalar_lea.vmem %s0, 8
  %v17 = vld [vmem:[%s16] sm:$0xf]
  %18 = xla_tuple %v17
  %19 = xla_tuple %18
  %v20 = vxor.u32 %v17, 2147483648
  %21 = xla_tuple %v20
  %s22 = scalar_lea.vmem %s1, 8
  %23 = vst [vmem:[%s22] sm:$0xf] %v20
  %s24 = scalar_lea.vmem %s0, 12
  %v25 = vld [vmem:[%s24] sm:$0xf]
  %26 = xla_tuple %v25
  %27 = xla_tuple %26
  %v28 = vxor.u32 %v25, 2147483648
  %29 = xla_tuple %v28
  %s30 = scalar_lea.vmem %s1, 12
  %31 = vst [vmem:[%s30] sm:$0xf] %v28

// kernel: sub.3
$region0: #{sub.3}
  #allocation0 [shape = 's32[1]{0}', space=sflag, size = 0x4, scoped, tag = 'scoped memory for sub.3']
  %s0 = inlined_call_operand.vmem [shape: f32[4,4], index: 0, kind: input, shape index: {}]
  %s1 = inlined_call_operand.vmem [shape: f32[4,4], index: 1, kind: input, shape index: {}]
  %s2 = inlined_call_operand.vmem [shape: f32[4,4], index: 2, kind: output, shape index: {}]
  %v3 = vld [vmem:[%s0] sm:$0xf]
  %v4 = vld [vmem:[%s1] sm:$0xf]
  %5 = xla_tuple %v3, %v4
  %6 = xla_tuple %5
  %v7 = vsub.f32 %v3, %v4
  %8 = xla_tuple %v7
  %9 = vst [vmem:[%s2] sm:$0xf] %v7

// kernel: rovasz_ce_loss.2
$region0: #{rovasz_ce_loss.2}
  #allocation0 [shape = 'u32[]', space=smem, size = 0x4, offset = 0x4, fixed_abs, tag = 'smem constant byte address 0x4 - core index']
  #allocation1 [shape = 'u32[72,128]{1,0:T(1,128)}', space=vmem, size = 0x9000, scoped, tag = 'internal scratch']
  %s0 = inlined_call_operand.vmem [shape: f32[2,4,256], index: 0, kind: input, shape index: {}]
  %s1 = inlined_call_operand.vmem [shape: s32[2,1,256], index: 1, kind: input, shape index: {}]
  %s2 = inlined_call_operand.vmem [shape: f32[4,512], index: 2, kind: output, shape index: {0}]
  %s3 = inlined_call_operand.vmem [shape: bf16[4,512], index: 3, kind: output, shape index: {1}]
  %s4 = inlined_call_operand.vmem [shape: f32[1,512], index: 4, kind: output, shape index: {2}]
  %5 = xla_tuple %s2, %s3, %s4
  %s6 = sld [smem:[#allocation0]]
  $region57: #{rovasz_ce_loss.2} parent=0
    _
  %s8 = ssub.s32 1, %s6
  %s9 = scalar_select 0, %s8, %s6
  loop: start=0, step=1, limit=4
  $region2: #{rovasz_ce_loss.2} parent=0 // loop_pre_header
    _
  $region3: #{rovasz_ce_loss.2} parent=0 // loop_header
    %s11 = sphi 0, %s15
    %p12 = scmp.ge.s32.totalorder %s11, 4
    %s18 = sphi 0, %s30
    %s19 = sphi 0, %s26
    %s20 = sphi 0, %s18
    %s21 = sphi 0, %s19
    %s22 = sphi 0, %s20
    %s23 = sphi 0, %s21
    %s35 = sphi 0, %s37
    %s38 = sphi 0, %s35
    %s39 = sphi 0, %s38
    %s55 = sphi 0, %s39
    %s63 = sphi 0, %s65
    %s66 = sphi 0, %s63
    %s67 = sphi 0, %s66
    %s83 = sphi 0, %s67
    %s91 = sphi 0, %s93
    %s94 = sphi 0, %s91
    %s95 = sphi 0, %s94
    %s111 = sphi 0, %s95
    %s119 = sphi 0, %s121
    %s122 = sphi 0, %s119
    %s123 = sphi 0, %s122
    %s139 = sphi 0, %s123
    %s147 = sphi 0, %s149
    %s150 = sphi 0, %s147
    %s151 = sphi 0, %s150
    %s167 = sphi 0, %s151
  $region4: #{rovasz_ce_loss.2} parent=0 // loop_header_branch
    %14 = sbr.rel (%p12) target = $region8
  $region5: #{rovasz_ce_loss.2} parent=0 // loop_body
    %s16 = ssub.s32 %s11, 1
    %s17 = ssub.s32 %s11, 2
    %s24 = sadd.s32 1, %s19
    %p25 = scmp.ge.s32.totalorder %s24, 1
    %s26 = scalar_select %p25, 0, %s24
    %s27 = sadd.s32 1, %s18
    %s28 = scalar_select %p25, %s27, %s18
    %p29 = scmp.ge.s32.totalorder %s28, 2
    %s30 = scalar_select %p29, 0, %s28
    %s31 = ssub.s32 %s18, %s30
    %s32 = ssub.s32 %s19, %s26
    %s33 = sor.u32 %s31, %s32
    %p34 = scmp.eq.s32.totalorder %s33, 0
    %s36 = sadd.s32 %s35, 1
    %s37 = scalar_select %p34, %s35, %s36
    %p40 = pneg %p34
    %p41 = scmp.eq.s32.totalorder %s11, 1
    %p42 = por %p40, %p41
    %p43 = scmp.ne.s32.totalorder %s35, %s38
    %p44 = scmp.eq.s32.totalorder %s11, 0
    %p45 = por %p43, %p44
    %p46 = scmp.ne.s32.totalorder %s35, %s38
    %p47 = scmp.eq.s32.totalorder %s16, 1
    %p48 = por %p46, %p47
    %p49 = scmp.ne.s32.totalorder %s38, %s39
    %p50 = scmp.eq.s32.totalorder %s16, 0
    %p51 = por %p49, %p50
    %p52 = scmp.ne.s32.totalorder %s38, %s39
    %p53 = scmp.eq.s32.totalorder %s17, 1
    %p54 = por %p52, %p53
    %p56 = scmp.ne.s32.totalorder %s39, %s55
    %p57 = scmp.eq.s32.totalorder %s17, 0
    %p58 = por %p56, %p57
    %s59 = ssub.s32 %s18, %s30
    %s60 = ssub.s32 %s19, %s26
    %s61 = sor.u32 %s59, %s60
    %p62 = scmp.eq.s32.totalorder %s61, 0
    %s64 = sadd.s32 %s63, 1
    %s65 = scalar_select %p62, %s63, %s64
    %p68 = pneg %p62
    %p69 = scmp.eq.s32.totalorder %s11, 1
    %p70 = por %p68, %p69
    %p71 = scmp.ne.s32.totalorder %s63, %s66
    %p72 = scmp.eq.s32.totalorder %s11, 0
    %p73 = por %p71, %p72
    %p74 = scmp.ne.s32.totalorder %s63, %s66
    %p75 = scmp.eq.s32.totalorder %s16, 1
    %p76 = por %p74, %p75
    %p77 = scmp.ne.s32.totalorder %s66, %s67
    %p78 = scmp.eq.s32.totalorder %s16, 0
    %p79 = por %p77, %p78
    %p80 = scmp.ne.s32.totalorder %s66, %s67
    %p81 = scmp.eq.s32.totalorder %s17, 1
    %p82 = por %p80, %p81
    %p84 = scmp.ne.s32.totalorder %s67, %s83
    %p85 = scmp.eq.s32.totalorder %s17, 0
    %p86 = por %p84, %p85
    %s87 = sadd.s32 %s18, %s19
    %s88 = sadd.s32 %s30, %s26
    %s89 = ssub.s32 %s87, %s88
    %p90 = scmp.eq.s32.totalorder %s89, 0
    %s92 = sadd.s32 %s91, 1
    %s93 = scalar_select %p90, %s91, %s92
    %p96 = pneg %p90
    %p97 = scmp.eq.s32.totalorder %s11, 1
    %p98 = por %p96, %p97
    %p99 = scmp.ne.s32.totalorder %s91, %s94
    %p100 = scmp.eq.s32.totalorder %s11, 0
    %p101 = por %p99, %p100
    %p102 = scmp.ne.s32.totalorder %s91, %s94
    %p103 = scmp.eq.s32.totalorder %s16, 1
    %p104 = por %p102, %p103
    %p105 = scmp.ne.s32.totalorder %s94, %s95
    %p106 = scmp.eq.s32.totalorder %s16, 0
    %p107 = por %p105, %p106
    %p108 = scmp.ne.s32.totalorder %s94, %s95
    %p109 = scmp.eq.s32.totalorder %s17, 1
    %p110 = por %p108, %p109
    %p112 = scmp.ne.s32.totalorder %s95, %s111
    %p113 = scmp.eq.s32.totalorder %s17, 0
    %p114 = por %p112, %p113
    %s115 = sadd.s32 %s18, %s19
    %s116 = sadd.s32 %s30, %s26
    %s117 = ssub.s32 %s115, %s116
    %p118 = scmp.eq.s32.totalorder %s117, 0
    %s120 = sadd.s32 %s119, 1
    %s121 = scalar_select %p118, %s119, %s120
    %p124 = pneg %p118
    %p125 = scmp.eq.s32.totalorder %s11, 1
    %p126 = por %p124, %p125
    %p127 = scmp.ne.s32.totalorder %s119, %s122
    %p128 = scmp.eq.s32.totalorder %s11, 0
    %p129 = por %p127, %p128
    %p130 = scmp.ne.s32.totalorder %s119, %s122
    %p131 = scmp.eq.s32.totalorder %s16, 1
    %p132 = por %p130, %p131
    %p133 = scmp.ne.s32.totalorder %s122, %s123
    %p134 = scmp.eq.s32.totalorder %s16, 0
    %p135 = por %p133, %p134
    %p136 = scmp.ne.s32.totalorder %s122, %s123
    %p137 = scmp.eq.s32.totalorder %s17, 1
    %p138 = por %p136, %p137
    %p140 = scmp.ne.s32.totalorder %s123, %s139
    %p141 = scmp.eq.s32.totalorder %s17, 0
    %p142 = por %p140, %p141
    %s143 = sadd.s32 %s18, %s19
    %s144 = sadd.s32 %s30, %s26
    %s145 = ssub.s32 %s143, %s144
    %p146 = scmp.eq.s32.totalorder %s145, 0
    %s148 = sadd.s32 %s147, 1
    %s149 = scalar_select %p146, %s147, %s148
    %p152 = pneg %p146
    %p153 = scmp.eq.s32.totalorder %s11, 1
    %p154 = por %p152, %p153
    %p155 = scmp.ne.s32.totalorder %s147, %s150
    %p156 = scmp.eq.s32.totalorder %s11, 0
    %p157 = por %p155, %p156
    %p158 = scmp.ne.s32.totalorder %s147, %s150
    %p159 = scmp.eq.s32.totalorder %s16, 1
    %p160 = por %p158, %p159
    %p161 = scmp.ne.s32.totalorder %s150, %s151
    %p162 = scmp.eq.s32.totalorder %s16, 0
    %p163 = por %p161, %p162
    %p164 = scmp.ne.s32.totalorder %s150, %s151
    %p165 = scmp.eq.s32.totalorder %s17, 1
    %p166 = por %p164, %p165
    %p168 = scmp.ne.s32.totalorder %s151, %s167
    %p169 = scmp.eq.s32.totalorder %s17, 0
    %p170 = por %p168, %p169
    %p171 = scmp.le.s32.totalorder 1, %s11
    %p172 = scmp.lt.s32.totalorder %s11, 3
    %p173 = pnand %p171, %p172
    %p174 = pneg %p173
    // Predicated region
    $region9: #{rovasz_ce_loss.2} parent=5 // pred_check
      _
    $region10: #{rovasz_ce_loss.2} parent=5 // pred_check_branch
      %176 = sbr.rel (%p173) target = $region12
    $region11: #{rovasz_ce_loss.2} parent=5 // pred_region
      %s177 = ssub.s32 %s11, 1
    $region12: #{rovasz_ce_loss.2} parent=5 // pred_fallthru
      _
    %p178 = scmp.lt.s32.totalorder %s11, 2
    // Predicated region
    $region13: #{rovasz_ce_loss.2} parent=5 // pred_check
      %p179 = pneg %p178
    $region14: #{rovasz_ce_loss.2} parent=5 // pred_check_branch
      %181 = sbr.rel (%p179) target = $region16
    $region15: #{rovasz_ce_loss.2} parent=5 // pred_region
      // Predicated region
      $region17: #{rovasz_ce_loss.2} parent=15 // pred_check
        %p182 = pneg %p45
      $region18: #{rovasz_ce_loss.2} parent=15 // pred_check_branch
        %184 = sbr.rel (%p182) target = $region20
      $region19: #{rovasz_ce_loss.2} parent=15 // pred_region
        %s185 = smul.u32 2, %s19
        %p186 = scmp.lt.s32.totalorder %s18, 1
        %s187 = scalar_select %p186, %s18, 1
        %p188 = scmp.lt.s32.totalorder %s185, 1
        %s189 = scalar_select %p188, %s185, 1
        %s190 = smul.addr %s187, 2
        %s191 = sadd.s32 %s189, %s190
        %s192 = smul.addr %s191, 4
        %s193 = scalar_lea.vmem %s0, %s192
        %s194 = smul.u32 2, %s19
      $region20: #{rovasz_ce_loss.2} parent=15 // pred_fallthru
        _
      // Predicated region
      $region21: #{rovasz_ce_loss.2} parent=15 // pred_check
        %p195 = pneg %p73
      $region22: #{rovasz_ce_loss.2} parent=15 // pred_check_branch
        %197 = sbr.rel (%p195) target = $region24
      $region23: #{rovasz_ce_loss.2} parent=15 // pred_region
        %s198 = smul.u32 2, %s19
        %p199 = scmp.lt.s32.totalorder %s18, 1
        %s200 = scalar_select %p199, %s18, 1
        %p201 = scmp.lt.s32.totalorder %s198, 1
        %s202 = scalar_select %p201, %s198, 1
        %s203 = smul.addr %s200, 2
        %s204 = sadd.s32 %s202, %s203
        %s205 = scalar_lea.vmem %s1, %s204
        %s206 = smul.u32 2, %s19
      $region24: #{rovasz_ce_loss.2} parent=15 // pred_fallthru
        _
    $region16: #{rovasz_ce_loss.2} parent=5 // pred_fallthru
      _
    %p207 = scmp.le.s32.totalorder 1, %s11
    %p208 = scmp.lt.s32.totalorder %s11, 3
    %p209 = pnand %p207, %p208
    %p210 = pneg %p209
    // Predicated region
    $region25: #{rovasz_ce_loss.2} parent=5 // pred_check
      _
    $region26: #{rovasz_ce_loss.2} parent=5 // pred_check_branch
      %212 = sbr.rel (%p209) target = $region28
    $region27: #{rovasz_ce_loss.2} parent=5 // pred_region
      %s213 = ssub.s32 %s11, 1
      %s214 = smul.u32 2, %s21
      %p215 = scmp.lt.s32.totalorder %s20, 1
      %s216 = scalar_select %p215, %s20, 1
      %p217 = scmp.lt.s32.totalorder %s214, 1
      %s218 = scalar_select %p217, %s214, 1
      %s219 = smul.addr %s216, 2
      %s220 = sadd.s32 %s218, %s219
      %s221 = smul.addr %s220, 4
      %s222 = scalar_lea.vmem %s0, %s221
      %p223 = pneg %p51
      %p224 = pneg %p48
      %s225 = smul.u32 2, %s21
      %p226 = scmp.lt.s32.totalorder %s20, 1
      %s227 = scalar_select %p226, %s20, 1
      %p228 = scmp.lt.s32.totalorder %s225, 1
      %s229 = scalar_select %p228, %s225, 1
      %s230 = smul.addr %s227, 2
      %s231 = sadd.s32 %s229, %s230
      %s232 = scalar_lea.vmem %s1, %s231
      %p233 = pneg %p79
      %p234 = pneg %p76
      %p235 = pneg %p107
      %p236 = pneg %p104
      %s237 = sadd.s32 %s20, %s21
      %s238 = smul.u32 2, %s237
      %p239 = scmp.lt.s32.totalorder %s238, 3
      %s240 = scalar_select %p239, %s238, 3
      %s241 = smul.addr %s240, 4
      %s242 = scalar_lea.vmem %s2, %s241
      %p243 = pneg %p135
      %p244 = pneg %p132
      %s245 = sadd.s32 %s20, %s21
      %s246 = smul.u32 2, %s245
      %p247 = scmp.lt.s32.totalorder %s246, 3
      %s248 = scalar_select %p247, %s246, 3
      %s249 = smul.addr %s248, 2
      %s250 = scalar_lea.vmem %s3, %s249
      %p251 = pneg %p163
      %p252 = pneg %p160
      %s253 = sadd.s32 %s20, %s21
      %s254 = smul.u32 2, %s253
      %p255 = scmp.lt.s32.totalorder %s254, 3
      %s256 = scalar_select %p255, %s254, 3
      %s257 = scalar_lea.vmem %s4, %s256
      %s258 = smul.u32 2, %s21
      %p259 = scmp.lt.s32.totalorder %s20, 1
      %s260 = scalar_select %p259, %s20, 1
      %p261 = scmp.lt.s32.totalorder %s258, 1
      %s262 = scalar_select %p261, %s258, 1
      %s263 = smul.addr %s260, 2
      %s264 = sadd.s32 %s262, %s263
      %s265 = smul.addr %s264, 4
      %s266 = scalar_lea.vmem %s0, %s265
      %s267 = smul.u32 2, %s21
      %s268 = smul.u32 2, %s21
      %p269 = scmp.lt.s32.totalorder %s20, 1
      %s270 = scalar_select %p269, %s20, 1
      %p271 = scmp.lt.s32.totalorder %s268, 1
      %s272 = scalar_select %p271, %s268, 1
      %s273 = smul.addr %s270, 2
      %s274 = sadd.s32 %s272, %s273
      %s275 = scalar_lea.vmem %s1, %s274
      %s276 = smul.u32 2, %s21
      %s277 = sadd.s32 %s20, %s21
      %s278 = smul.u32 2, %s277
      %p279 = scmp.lt.s32.totalorder %s278, 3
      %s280 = scalar_select %p279, %s278, 3
      %s281 = smul.addr %s280, 4
      %s282 = scalar_lea.vmem %s2, %s281
      %s283 = sadd.s32 %s20, %s21
      %s284 = smul.u32 2, %s283
      %s285 = sadd.s32 %s20, %s21
      %s286 = smul.u32 2, %s285
      %p287 = scmp.lt.s32.totalorder %s286, 3
      %s288 = scalar_select %p287, %s286, 3
      %s289 = smul.addr %s288, 2
      %s290 = scalar_lea.vmem %s3, %s289
      %s291 = sadd.s32 %s20, %s21
      %s292 = smul.u32 2, %s291
      %s293 = sadd.s32 %s20, %s21
      %s294 = smul.u32 2, %s293
      %p295 = scmp.lt.s32.totalorder %s294, 3
      %s296 = scalar_select %p295, %s294, 3
      %s297 = scalar_lea.vmem %s4, %s296
      %s298 = sadd.s32 %s20, %s21
      %s299 = smul.u32 2, %s298
      %v300 = vld [vmem:[%s266] sm:$0xff]
      %v301 = vld [vmem:[%s275] sm:$0x3]
      %303 = vst [vmem:[#allocation1] ss:$2 sm:$0xff] %v300
      %v304 = vld.sshfl [vmem:[#allocation1] sm:$0xff pattern:$0x75316420]
      %v305 = vld.sshfl [vmem:[#allocation1 + $0x8] sm:$0xff pattern:$0x75316420]
      %vm308 = vcmask 1043456
      %v309 = vsel %vm308, %v304, -inf
      %v310 = vrot.slane %v309, 4
      %v311 = vmax.f32 %v309, %v310
      %v312 = vrot.slane %v311, 2
      %v313 = vmax.f32 %v311, %v312
      %v314 = vrot.slane %v313, 1
      %v315 = vmax.f32 %v313, %v314
      %v316 = vsel %vm308, %v305, -inf
      %v317 = vrot.slane %v316, 4
      %v318 = vmax.f32 %v316, %v317
      %v319 = vrot.slane %v318, 2
      %v320 = vmax.f32 %v318, %v319
      %v321 = vrot.slane %v320, 1
      %v322 = vmax.f32 %v320, %v321
      %v325 = vrot.slane %v322, 4
      %v326 = vsel %vm308, %v315, %v325
      %v328 = vsub.f32 %v300, %v326
      %v329 = vmul.f32 %v328, 1.442695
      %v330 = vpow.pop %v329
      %332 = vst [vmem:[#allocation1] ss:$2 sm:$0xff] %v330
      %v333 = vld.sshfl [vmem:[#allocation1] sm:$0xff pattern:$0x75316420]
      %v334 = vld.sshfl [vmem:[#allocation1 + $0x8] sm:$0xff pattern:$0x75316420]
      %v337 = vsel %vm308, %v333, 0.0
      %v338 = vrot.slane %v337, 4
      %v339 = vadd.f32 %v337, %v338
      %v340 = vrot.slane %v339, 2
      %v341 = vadd.f32 %v339, %v340
      %v342 = vrot.slane %v341, 1
      %v343 = vadd.f32 %v341, %v342
      %v344 = vsel %vm308, %v334, 0.0
      %v345 = vrot.slane %v344, 4
      %v346 = vadd.f32 %v344, %v345
      %v347 = vrot.slane %v346, 2
      %v348 = vadd.f32 %v346, %v347
      %v349 = vrot.slane %v348, 1
      %v350 = vadd.f32 %v348, %v349
      %v351 = vrcp.pop %v343
      %v352 = vmul.f32 %v343, %v351
      %v353 = vsub.f32 1.0, %v352
      %v354 = vmul.f32 %v351, %v353
      %v355 = vadd.f32 %v351, %v354
      %vm356 = vweird.f32 %v343
      %vm357 = vweird.f32 %v351
      %vm358 = vmor %vm356, %vm357
      %v359 = vsel %vm358, %v351, %v355
      %v360 = vand.u32 2147483647, %v343
      %vm361 = vcmp.eq.f32.partialorder %v360, 8.507059e+37
      %v362 = vand.u32 %v343, 2147483648
      %v363 = vor.u32 1.1754944e-38, %v362
      %v364 = vsel %vm361, %v363, %v359
      %v365 = vmul.f32 1.0, %v364
      %v366 = vrcp.pop %v350
      %v367 = vmul.f32 %v350, %v366
      %v368 = vsub.f32 1.0, %v367
      %v369 = vmul.f32 %v366, %v368
      %v370 = vadd.f32 %v366, %v369
      %vm371 = vweird.f32 %v350
      %vm372 = vweird.f32 %v366
      %vm373 = vmor %vm371, %vm372
      %v374 = vsel %vm373, %v366, %v370
      %v375 = vand.u32 2147483647, %v350
      %vm376 = vcmp.eq.f32.partialorder %v375, 8.507059e+37
      %v377 = vand.u32 %v350, 2147483648
      %v378 = vor.u32 1.1754944e-38, %v377
      %v379 = vsel %vm376, %v378, %v374
      %v380 = vmul.f32 1.0, %v379
      %v383 = vrot.slane %v380, 4
      %v384 = vsel %vm308, %v365, %v383
      %v386 = vmul.f32 %v330, %v384
      %v387 = vlog2.pop %v343
      %v388 = vmul.f32 %v387, 0.6931472
      %v389 = vlog2.pop %v350
      %v390 = vmul.f32 %v389, 0.6931472
      %v393 = vrot.slane %v390, 4
      %v394 = vsel %vm308, %v388, %v393
      %v396 = vsub.f32 %v328, %v394
      %v397 = vlaneseq
      %v398 = vshrl.u32 %v397, 7
      %v399 = vperm.slane %v301, 0
      %v400 = vperm.slane %v301, 1
      %vm401 = vcmp.eq.s32.totalorder %v399, %v398
      %vm402 = vcmp.eq.s32.totalorder %v400, %v398
      %v403 = vsel %vm401, 1, 0
      %v404 = vsel %vm402, 1, 0
      %v405 = vcvt.s32.f32 %v403
      %v406 = vcvt.s32.f32 %v404
      %408 = vst [vmem:[#allocation1] ss:$2 sm:$0xff] %v386
      %v409 = vld.sshfl [vmem:[#allocation1] sm:$0xff pattern:$0x75316420]
      %v410 = vld.sshfl [vmem:[#allocation1 + $0x8] sm:$0xff pattern:$0x75316420]
      %v413 = vsub.f32 %v405, %v409
      %v414 = vsub.f32 %v406, %v410
      %v415 = vand.u32 2147483647, %v413
      %v416 = vand.u32 2147483647, %v414
      %v419 = vrot.slane %v416, 4
      %v420 = vsel %vm308, %v415, %v419
      %422 = vst [vmem:[%s282] sm:$0xff] %v420
      %v423 = vpack.c.bf16 %v406, %v405
      %v425 = vrot.slane %v423, 2
      %vm426 = vcmask 1041408
      %v429 = vsel %vm426, %v423, %v425
      %431 = vst [vmem:[%s290] sm:$0xf] %v429
      %433 = vst [vmem:[#allocation1] ss:$2 sm:$0xff] %v396
      %v434 = vld.sshfl [vmem:[#allocation1] sm:$0xff pattern:$0x75316420]
      %v435 = vld.sshfl [vmem:[#allocation1 + $0x8] sm:$0xff pattern:$0x75316420]
      %v438 = vmul.f32 %v405, %v434
      %v439 = vmul.f32 %v406, %v435
      %v440 = vsel %vm308, %v438, 0.0
      %v441 = vrot.slane %v440, 4
      %v442 = vadd.f32 %v440, %v441
      %v443 = vrot.slane %v442, 2
      %v444 = vadd.f32 %v442, %v443
      %v445 = vrot.slane %v444, 1
      %v446 = vadd.f32 %v444, %v445
      %v447 = vsel %vm308, %v439, 0.0
      %v448 = vrot.slane %v447, 4
      %v449 = vadd.f32 %v447, %v448
      %v450 = vrot.slane %v449, 2
      %v451 = vadd.f32 %v449, %v450
      %v452 = vrot.slane %v451, 1
      %v453 = vadd.f32 %v451, %v452
      %v454 = vsub.f32 0.0, %v446
      %v455 = vsub.f32 0.0, %v453
      %v458 = vrot.slane %v455, 7
      %vm459 = vcmask 1040384
      %v460 = vsel %vm459, %v454, %v458
      %v462 = vlaneseq
      %vm463 = vcmp.ge.s32.totalorder %v462, 0
      %vm464 = vcmp.lt.s32.totalorder %v462, 256
      %vm465 = vmand %vm463, %vm464
      %466 = vst.msk [vmem:[%s297] sm:$0x3] %vm465, %v460
      %s467 = sadd.s32 %s20, %s21
      %s468 = smul.u32 2, %s467
      %p469 = scmp.lt.s32.totalorder %s468, 3
      %s470 = scalar_select %p469, %s468, 3
      %s471 = smul.addr %s470, 4
      %s472 = scalar_lea.vmem %s2, %s471
      %s473 = sadd.s32 %s20, %s21
      %s474 = smul.u32 2, %s473
      %p475 = scmp.lt.s32.totalorder %s474, 3
      %s476 = scalar_select %p475, %s474, 3
      %s477 = smul.addr %s476, 2
      %s478 = scalar_lea.vmem %s3, %s477
      %s479 = sadd.s32 %s20, %s21
      %s480 = smul.u32 2, %s479
      %p481 = scmp.lt.s32.totalorder %s480, 3
      %s482 = scalar_select %p481, %s480, 3
      %s483 = scalar_lea.vmem %s4, %s482
      // Predicated region
      $region29: #{rovasz_ce_loss.2} parent=27 // pred_check
        %p484 = pneg %p104
      $region30: #{rovasz_ce_loss.2} parent=27 // pred_check_branch
        %486 = sbr.rel (%p484) target = $region32
      $region31: #{rovasz_ce_loss.2} parent=27 // pred_region
        %s487 = sadd.s32 %s20, %s21
        %s488 = smul.u32 2, %s487
      $region32: #{rovasz_ce_loss.2} parent=27 // pred_fallthru
        _
      // Predicated region
      $region33: #{rovasz_ce_loss.2} parent=27 // pred_check
        %p489 = pneg %p132
      $region34: #{rovasz_ce_loss.2} parent=27 // pred_check_branch
        %491 = sbr.rel (%p489) target = $region36
      $region35: #{rovasz_ce_loss.2} parent=27 // pred_region
        %s492 = sadd.s32 %s20, %s21
        %s493 = smul.u32 2, %s492
      $region36: #{rovasz_ce_loss.2} parent=27 // pred_fallthru
        _
      // Predicated region
      $region37: #{rovasz_ce_loss.2} parent=27 // pred_check
        %p494 = pneg %p160
      $region38: #{rovasz_ce_loss.2} parent=27 // pred_check_branch
        %496 = sbr.rel (%p494) target = $region40
      $region39: #{rovasz_ce_loss.2} parent=27 // pred_region
        %s497 = sadd.s32 %s20, %s21
        %s498 = smul.u32 2, %s497
      $region40: #{rovasz_ce_loss.2} parent=27 // pred_fallthru
        _
    $region28: #{rovasz_ce_loss.2} parent=5 // pred_fallthru
      _
    %p499 = scmp.le.s32.totalorder 2, %s11
    // Predicated region
    $region41: #{rovasz_ce_loss.2} parent=5 // pred_check
      %p500 = pneg %p499
    $region42: #{rovasz_ce_loss.2} parent=5 // pred_check_branch
      %502 = sbr.rel (%p500) target = $region44
    $region43: #{rovasz_ce_loss.2} parent=5 // pred_region
      %s503 = ssub.s32 %s11, 2
      // Predicated region
      $region45: #{rovasz_ce_loss.2} parent=43 // pred_check
        %p504 = pneg %p110
      $region46: #{rovasz_ce_loss.2} parent=43 // pred_check_branch
        %506 = sbr.rel (%p504) target = $region48
      $region47: #{rovasz_ce_loss.2} parent=43 // pred_region
        %s507 = sadd.s32 %s22, %s23
        %s508 = smul.u32 2, %s507
        %p509 = scmp.lt.s32.totalorder %s508, 3
        %s510 = scalar_select %p509, %s508, 3
        %s511 = smul.addr %s510, 4
        %s512 = scalar_lea.vmem %s2, %s511
      $region48: #{rovasz_ce_loss.2} parent=43 // pred_fallthru
        _
      // Predicated region
      $region49: #{rovasz_ce_loss.2} parent=43 // pred_check
        %p513 = pneg %p138
      $region50: #{rovasz_ce_loss.2} parent=43 // pred_check_branch
        %515 = sbr.rel (%p513) target = $region52
      $region51: #{rovasz_ce_loss.2} parent=43 // pred_region
        %s516 = sadd.s32 %s22, %s23
        %s517 = smul.u32 2, %s516
        %p518 = scmp.lt.s32.totalorder %s517, 3
        %s519 = scalar_select %p518, %s517, 3
        %s520 = smul.addr %s519, 2
        %s521 = scalar_lea.vmem %s3, %s520
      $region52: #{rovasz_ce_loss.2} parent=43 // pred_fallthru
        _
      // Predicated region
      $region53: #{rovasz_ce_loss.2} parent=43 // pred_check
        %p522 = pneg %p166
      $region54: #{rovasz_ce_loss.2} parent=43 // pred_check_branch
        %524 = sbr.rel (%p522) target = $region56
      $region55: #{rovasz_ce_loss.2} parent=43 // pred_region
        %s525 = sadd.s32 %s22, %s23
        %s526 = smul.u32 2, %s525
        %p527 = scmp.lt.s32.totalorder %s526, 3
        %s528 = scalar_select %p527, %s526, 3
        %s529 = scalar_lea.vmem %s4, %s528
      $region56: #{rovasz_ce_loss.2} parent=43 // pred_fallthru
        _
    $region44: #{rovasz_ce_loss.2} parent=5 // pred_fallthru
      _
  $region6: #{rovasz_ce_loss.2} parent=0 // loop_footer
    %s15 = sadd.s32 1, %s11
  $region7: #{rovasz_ce_loss.2} parent=0 // loop_footer_branch
    %10 = sbr.rel target = $region3
  $region8: #{rovasz_ce_loss.2} parent=0 // loop_exit
    _

// kernel: rovasz_ce_loss.3
$region0: #{rovasz_ce_loss.3}
  #allocation0 [shape = 'u32[]', space=smem, size = 0x4, offset = 0x4, fixed_abs, tag = 'smem constant byte address 0x4 - core index']
  #allocation1 [shape = 'u32[72,128]{1,0:T(1,128)}', space=vmem, size = 0x9000, scoped, tag = 'internal scratch']
  #allocation2 [shape = 'f32[1,1]{1,0:T(1,128)}', space=vmem, size = 0x200, scoped, tag = 'scratch operand']
  %s0 = inlined_call_operand.vmem [shape: f32[16,128], index: 0, kind: input, shape index: {}]
  %s1 = inlined_call_operand.vmem [shape: bf16[16,128], index: 1, kind: input, shape index: {}]
  %s2 = inlined_call_operand.vmem [shape: bf16[128,128], index: 2, kind: input, shape index: {}]
  %s3 = inlined_call_operand.vmem [shape: f32[16,3], index: 3, kind: input, shape index: {}]
  %s4 = inlined_call_operand.vmem [shape: f32[8,128], index: 4, kind: output, shape index: {}]
  %s5 = sld [smem:[#allocation0]]
  $region34: #{rovasz_ce_loss.3} parent=0
    _
  %s7 = ssub.s32 1, %s5
  %s8 = scalar_select 0, %s7, %s5
  // Predicated region
  $region2: #{rovasz_ce_loss.3} parent=0 // pred_check
    _
  $region3: #{rovasz_ce_loss.3} parent=0 // pred_check_branch
    %10 = sbr.rel (0) target = $region5
  $region4: #{rovasz_ce_loss.3} parent=0 // pred_region
    %s11 = sadd.s32 0, 0
    %s12 = smul.u32 2, %s11
    %p13 = scmp.lt.s32.totalorder %s12, 1
    %s14 = scalar_select %p13, %s12, 1
    %s15 = smul.addr %s14, 8
    %s16 = scalar_lea.vmem %s0, %s15
    %s17 = sadd.s32 0, 0
    %s18 = smul.u32 2, %s17
  $region5: #{rovasz_ce_loss.3} parent=0 // pred_fallthru
    _
  // Predicated region
  $region6: #{rovasz_ce_loss.3} parent=0 // pred_check
    _
  $region7: #{rovasz_ce_loss.3} parent=0 // pred_check_branch
    %20 = sbr.rel (0) target = $region9
  $region8: #{rovasz_ce_loss.3} parent=0 // pred_region
    %s21 = sadd.s32 0, 0
    %s22 = smul.u32 2, %s21
    %p23 = scmp.lt.s32.totalorder %s22, 1
    %s24 = scalar_select %p23, %s22, 1
    %s25 = smul.addr %s24, 4
    %s26 = scalar_lea.vmem %s1, %s25
    %s27 = sadd.s32 0, 0
    %s28 = smul.u32 2, %s27
  $region9: #{rovasz_ce_loss.3} parent=0 // pred_fallthru
    _
  // Predicated region
  $region10: #{rovasz_ce_loss.3} parent=0 // pred_check
    _
  $region11: #{rovasz_ce_loss.3} parent=0 // pred_check_branch
    %30 = sbr.rel (0) target = $region13
  $region12: #{rovasz_ce_loss.3} parent=0 // pred_region
    _
  $region13: #{rovasz_ce_loss.3} parent=0 // pred_fallthru
    _
  // Predicated region
  $region14: #{rovasz_ce_loss.3} parent=0 // pred_check
    _
  $region15: #{rovasz_ce_loss.3} parent=0 // pred_check_branch
    %32 = sbr.rel (0) target = $region17
  $region16: #{rovasz_ce_loss.3} parent=0 // pred_region
    %s33 = sadd.s32 0, 0
    %s34 = smul.u32 2, %s33
    %p35 = scmp.lt.s32.totalorder %s34, 1
    %s36 = scalar_select %p35, %s34, 1
    %s37 = smul.addr %s36, 8
    %s38 = scalar_lea.vmem %s3, %s37
    %s39 = sadd.s32 0, 0
    %s40 = smul.u32 2, %s39
  $region17: #{rovasz_ce_loss.3} parent=0 // pred_fallthru
    _
  %s41 = sadd.s32 0, 0
  %s42 = smul.u32 2, %s41
  %p43 = scmp.lt.s32.totalorder %s42, 1
  %s44 = scalar_select %p43, %s42, 1
  %s45 = smul.addr %s44, 8
  %s46 = scalar_lea.vmem %s0, %s45
  %s47 = sadd.s32 0, 0
  %s48 = smul.u32 2, %s47
  %p49 = scmp.lt.s32.totalorder %s48, 1
  %s50 = scalar_select %p49, %s48, 1
  %s51 = smul.addr %s50, 4
  %s52 = scalar_lea.vmem %s1, %s51
  %s53 = sadd.s32 0, 0
  %s54 = smul.u32 2, %s53
  %p55 = scmp.lt.s32.totalorder %s54, 1
  %s56 = scalar_select %p55, %s54, 1
  %s57 = smul.addr %s56, 8
  %s58 = scalar_lea.vmem %s3, %s57
  %s59 = sadd.s32 0, 0
  %s60 = smul.u32 2, %s59
  %p61 = scmp.lt.s32.totalorder %s60, 1
  %s62 = scalar_select %p61, %s60, 1
  %s63 = smul.addr %s62, 8
  %s64 = scalar_lea.vmem %s0, %s63
  %s65 = sadd.s32 0, 0
  %s66 = smul.u32 2, %s65
  %s67 = sadd.s32 0, 0
  %s68 = smul.u32 2, %s67
  %p69 = scmp.lt.s32.totalorder %s68, 1
  %s70 = scalar_select %p69, %s68, 1
  %s71 = smul.addr %s70, 4
  %s72 = scalar_lea.vmem %s1, %s71
  %s73 = sadd.s32 0, 0
  %s74 = smul.u32 2, %s73
  %s75 = sadd.s32 0, 0
  %s76 = smul.u32 2, %s75
  %p77 = scmp.lt.s32.totalorder %s76, 1
  %s78 = scalar_select %p77, %s76, 1
  %s79 = smul.addr %s78, 8
  %s80 = scalar_lea.vmem %s3, %s79
  %s81 = sadd.s32 0, 0
  %s82 = smul.u32 2, %s81
  %p83 = scmp.eq.s32.totalorder 0, 0
  // Predicated region
  $region18: #{rovasz_ce_loss.3} parent=0 // pred_check
    %p84 = pneg %p83
  $region19: #{rovasz_ce_loss.3} parent=0 // pred_check_branch
    %86 = sbr.rel (%p84) target = $region21
  $region20: #{rovasz_ce_loss.3} parent=0 // pred_region
    %vm87 = vcmask 0
    %88 = vst.msk [vmem:[#allocation2] sm:$0x1] %vm87, 0.0
  $region21: #{rovasz_ce_loss.3} parent=0 // pred_fallthru
    _
  %v89 = vld [vmem:[%s64] sm:$0xff]
  %v90 = vld [vmem:[%s64 + $0x8] sm:$0xff]
  %v91 = vld [vmem:[%s72] sm:$0xf]
  %v92 = vld [vmem:[%s72 + $0x4] sm:$0xf]
  %v93 = vunpack.c.l.bf16 %v91
  %v94 = vunpack.c.l.bf16 %v92
  %v95 = vld [vmem:[%s80] sm:$0xff]
  %v96 = vld [vmem:[%s80 + $0x8] sm:$0xff]
  %v97 = vld [vmem:[%s2] sm:$0xf]
  %v98 = vld [vmem:[%s2 + $0x4] sm:$0xf]
  %v99 = vld [vmem:[%s2 + $0x8] sm:$0xf]
  %v100 = vld [vmem:[%s2 + $0xc] sm:$0xf]
  %v101 = vld [vmem:[%s2 + $0x10] sm:$0xf]
  %v102 = vld [vmem:[%s2 + $0x14] sm:$0xf]
  %v103 = vld [vmem:[%s2 + $0x18] sm:$0xf]
  %v104 = vld [vmem:[%s2 + $0x1c] sm:$0xf]
  %v105 = vld [vmem:[%s2 + $0x20] sm:$0xf]
  %v106 = vld [vmem:[%s2 + $0x24] sm:$0xf]
  %v107 = vld [vmem:[%s2 + $0x28] sm:$0xf]
  %v108 = vld [vmem:[%s2 + $0x2c] sm:$0xf]
  %v109 = vld [vmem:[%s2 + $0x30] sm:$0xf]
  %v110 = vld [vmem:[%s2 + $0x34] sm:$0xf]
  %v111 = vld [vmem:[%s2 + $0x38] sm:$0xf]
  %v112 = vld [vmem:[%s2 + $0x3c] sm:$0xf]
  %114 = vset.pattern.permute.xlu0 0
  %115 = vperm.xlu0 %114, %v95
  %v116 = vpop.permute.xlu0 %115
  %119 = vset.pattern.permute.xlu0 0
  %120 = vperm.xlu0 %119, %v96
  %v121 = vpop.permute.xlu0 %120
  %v125 = vunpack.c.l.b16 %v91
  %v126 = vunpack.c.l.b16 %v92
  %v127 = vpack.c.b16 %v126, %v125
  %v145 = vunpack.c.l.b16 %v97
  %v146 = vunpack.c.l.b16 %v98
  %v147 = vunpack.c.l.b16 %v99
  %v148 = vunpack.c.l.b16 %v100
  %v149 = vunpack.c.l.b16 %v101
  %v150 = vunpack.c.l.b16 %v102
  %v151 = vunpack.c.l.b16 %v103
  %v152 = vunpack.c.l.b16 %v104
  %v153 = vunpack.c.l.b16 %v105
  %v154 = vunpack.c.l.b16 %v106
  %v155 = vunpack.c.l.b16 %v107
  %v156 = vunpack.c.l.b16 %v108
  %v157 = vunpack.c.l.b16 %v109
  %v158 = vunpack.c.l.b16 %v110
  %v159 = vunpack.c.l.b16 %v111
  %v160 = vunpack.c.l.b16 %v112
  %v161 = vpack.c.b16 %v146, %v145
  %v162 = vpack.c.b16 %v148, %v147
  %v163 = vpack.c.b16 %v150, %v149
  %v164 = vpack.c.b16 %v152, %v151
  %v165 = vpack.c.b16 %v154, %v153
  %v166 = vpack.c.b16 %v156, %v155
  %v167 = vpack.c.b16 %v158, %v157
  %v168 = vpack.c.b16 %v160, %v159
  %177 = vmatpush.bf16.msra.mxu0 %v168
  %178 = vmatpush.bf16.msra.mxu0 %v167
  %179 = vmatpush.bf16.msra.mxu0 %v166
  %180 = vmatpush.bf16.msra.mxu0 %v165
  %181 = vmatpush.bf16.msra.mxu0 %v164
  %182 = vmatpush.bf16.msra.mxu0 %v163
  %183 = vmatpush.bf16.msra.mxu0 %v162
  %184 = vmatpush.bf16.msra.mxu0 %v161
  %185 = vmatmul.bf16.gmra.mxu0 %v127
  %v186 = vpop.f32.mrf.mxu0
  %v187 = vadd.f32 %v116, %v186
  %v188 = vpop.f32.mrf.mxu0
  %v189 = vadd.f32 %v121, %v188
  %190 = vdwg.mxu0
  %v191 = vlaneseq
  %v192 = vand.u32 %v191, 127
  %v193 = vcvt.s32.f32 %v192
  %194 = vset.pattern.permute.xlu0 2
  %195 = vperm.xlu0 %194, %v95
  %v196 = vpop.permute.xlu0 %195
  %198 = vset.pattern.permute.xlu0 2
  %199 = vperm.xlu0 %198, %v96
  %v200 = vpop.permute.xlu0 %199
  %v202 = vadd.f32 %v196, %v193
  %v203 = vadd.f32 %v200, %v193
  %v204 = vadd.f32 %v202, 1.0
  %v205 = vadd.f32 %v203, 1.0
  %v206 = vsub.f32 %v204, %v187
  %v207 = vsub.f32 %v205, %v189
  %208 = vset.pattern.permute.xlu0 1
  %209 = vperm.xlu0 %208, %v95
  %v210 = vpop.permute.xlu0 %209
  %212 = vset.pattern.permute.xlu0 1
  %213 = vperm.xlu0 %212, %v96
  %v214 = vpop.permute.xlu0 %213
  %v216 = vsub.f32 %v210, %v187
  %v217 = vsub.f32 %v214, %v189
  %v218 = vadd.f32 %v210, %v206
  %v219 = vadd.f32 %v214, %v207
  %v220 = vsub.f32 %v187, %v93
  %v221 = vsub.f32 %v189, %v94
  %v222 = vsub.f32 %v210, %v220
  %v223 = vsub.f32 %v214, %v221
  %v224 = vsub.f32 %v204, 1.0
  %v225 = vsub.f32 %v205, 1.0
  %v226 = vadd.f32 %v210, %v224
  %v227 = vadd.f32 %v214, %v225
  %v228 = vsub.f32 %v226, %v220
  %v229 = vsub.f32 %v227, %v221
  %v230 = vmax.f32 %v228, 1.0
  %v231 = vmax.f32 %v229, 1.0
  %v232 = vmul.f32 %v222, %v218
  %v233 = vmul.f32 %v223, %v219
  %v234 = vmul.f32 %v216, %v230
  %v235 = vmul.f32 %v217, %v231
  %v236 = vsub.f32 %v232, %v234
  %v237 = vsub.f32 %v233, %v235
  %v238 = vmul.f32 %v218, %v230
  %v239 = vmul.f32 %v219, %v231
  %v240 = vrcp.pop %v238
  %v241 = vmul.f32 %v238, %v240
  %v242 = vsub.f32 1.0, %v241
  %v243 = vmul.f32 %v240, %v242
  %v244 = vadd.f32 %v240, %v243
  %vm245 = vweird.f32 %v238
  %vm246 = vweird.f32 %v240
  %vm247 = vmor %vm245, %vm246
  %v248 = vsel %vm247, %v240, %v244
  %v249 = vand.u32 2147483647, %v238
  %vm250 = vcmp.eq.f32.partialorder %v249, 8.507059e+37
  %v251 = vand.u32 %v238, 2147483648
  %v252 = vor.u32 1.1754944e-38, %v251
  %v253 = vsel %vm250, %v252, %v248
  %v254 = vmul.f32 %v236, %v253
  %v255 = vrcp.pop %v239
  %v256 = vmul.f32 %v239, %v255
  %v257 = vsub.f32 1.0, %v256
  %v258 = vmul.f32 %v255, %v257
  %v259 = vadd.f32 %v255, %v258
  %vm260 = vweird.f32 %v239
  %vm261 = vweird.f32 %v255
  %vm262 = vmor %vm260, %vm261
  %v263 = vsel %vm262, %v255, %v259
  %v264 = vand.u32 2147483647, %v239
  %vm265 = vcmp.eq.f32.partialorder %v264, 8.507059e+37
  %v266 = vand.u32 %v239, 2147483648
  %v267 = vor.u32 1.1754944e-38, %v266
  %v268 = vsel %vm265, %v267, %v263
  %v269 = vmul.f32 %v237, %v268
  %vm270 = vcmp.gt.f32.partialorder %v95, 0.0
  %vm271 = vcmp.gt.f32.partialorder %v96, 0.0
  %v272 = vsel %vm270, 1, 0
  %v273 = vsel %vm271, 1, 0
  %v274 = vcvt.s32.f32 %v272
  %v275 = vcvt.s32.f32 %v273
  %v276 = vld [vmem:[#allocation2] sm:$0x1]
  %v277 = vmul.f32 %v89, %v254
  %v278 = vmul.f32 %v90, %v269
  %280 = vset.pattern.permute.xlu0 1
  %281 = vperm.xlu0 %280, %v274
  %v282 = vpop.permute.xlu0 %281
  %285 = vset.pattern.permute.xlu0 1
  %286 = vperm.xlu0 %285, %v275
  %v287 = vpop.permute.xlu0 %286
  %v289 = vmul.f32 %v277, %v282
  %v290 = vmul.f32 %v278, %v287
  %v291 = vadd.f32 %v289, %v290
  %292 = vadd.xlane.f32.xlu0 %v291
  %v293 = vpop.xlane.xlu0 %292
  %v294 = vrot.slane %v293, 4
  %v295 = vadd.f32 %v293, %v294
  %v296 = vrot.slane %v295, 2
  %v297 = vadd.f32 %v295, %v296
  %v298 = vrot.slane %v297, 1
  %v299 = vadd.f32 %v297, %v298
  %s300 = vtos %v299
  %v301 = vstv %s300
  %v302 = vadd.f32 %v276, %v301
  %vm303 = vcmask 0
  %304 = vst.msk [vmem:[#allocation2] sm:$0x1] %vm303, %v302
  // Predicated region
  $region22: #{rovasz_ce_loss.3} parent=0 // pred_check
    %p305 = pneg %p83
  $region23: #{rovasz_ce_loss.3} parent=0 // pred_check_branch
    %307 = sbr.rel (%p305) target = $region25
  $region24: #{rovasz_ce_loss.3} parent=0 // pred_region
    %v308 = vld [vmem:[#allocation2] sm:$0x1]
    %v310 = vperm.slane %v308, 0
    %311 = vset.pattern.permute.xlu0 0
    %312 = vperm.xlu0 %311, %v310
    %v313 = vpop.permute.xlu0 %312
    %315 = vst [vmem:[%s4] sm:$0xff] %v313
  $region25: #{rovasz_ce_loss.3} parent=0 // pred_fallthru
    _
  // Predicated region
  $region26: #{rovasz_ce_loss.3} parent=0 // pred_check
    _
  $region27: #{rovasz_ce_loss.3} parent=0 // pred_check_branch
    %317 = sbr.rel (0) target = $region29
  $region28: #{rovasz_ce_loss.3} parent=0 // pred_region
    _
  $region29: #{rovasz_ce_loss.3} parent=0 // pred_fallthru
    _
  // Predicated region
  $region30: #{rovasz_ce_loss.3} parent=0 // pred_check
    _
  $region31: #{rovasz_ce_loss.3} parent=0 // pred_check_branch
    %319 = sbr.rel (0) target = $region33
  $region32: #{rovasz_ce_loss.3} parent=0 // pred_region
    _
  $region33: #{rovasz_ce_loss.3} parent=0 // pred_fallthru
    _

</llo_original>
